<compile_context>
chip_gen: v7x
topology: tpu7x:2x2x1
jax: 0.10.0
libtpu: 0.0.40
codegen_flags: <defaults>
</compile_context>

<pallas_src>
import jax
import jax.numpy as jnp
from jax import lax
from jax.experimental import pallas as pl
from jax.experimental.pallas import tpu as pltpu

IN_F = 3
HID = 2
OUT_F = 4
LN_EPS = 1e-5

_LANE = 128
_SUB = 8
_MAX_ROWS = 512   # sublane rows per grid step -> 512*128 = 65536 batch elems/step

# Packed-parameter layout (flat f32[20] in SMEM):
#   [ 0: 3)  dw  = 0.5*(w1[0,:] - w1[1,:])                     (3,)
#   [ 3]     db  = 0.5*(b1[0]  - b1[1])                        ()
#   [ 4:12)  a_r = wh[r,0]*gamma0 - wh[r,1]*gamma1             (8,)  rows: head1 then head2
#   [12:20)  c_r = wh[r,0]*beta0  + wh[r,1]*beta1 + bh[r]      (8,)


def _mh_kernel(p_ref, x_ref, out_ref):
    # x_ref: (3, Rt, 128)   out_ref: (8, Rt, 128) = [head1 rows 0..3 | head2 rows 0..3]
    x0 = x_ref[0]
    x1 = x_ref[1]
    x2 = x_ref[2]

    # Fused trunk + LayerNorm(2):  d = (h0 - h1)/2  (affine in x),
    # normalized feature pair is (+z, -z) with z = d * rsqrt(d^2 + eps).
    d = p_ref[0] * x0 + p_ref[1] * x1 + p_ref[2] * x2 + p_ref[3]
    z = d * lax.rsqrt(d * d + LN_EPS)                 # rsqrt -> EUP slot

    # Both heads, gamma/beta and the (+z, -z) structure folded into (a_r, c_r).
    for r in range(2 * OUT_F):
        out_ref[r] = p_ref[4 + r] * z + p_ref[12 + r]   # full-tile unmasked store


def multi_head_test_net(x, params):
    """x: (B, 3) float32.  Returns (out1, out2), each (B, 4) float32."""
    B = x.shape[0]
    (w1, b1, gamma, beta, wh1, bh1, wh2, bh2) = params

    # --- wrapper glue (plain JAX): fold the whole network into 20 scalars ---
    dw = 0.5 * (w1[0, :] - w1[1, :])                   # (3,)
    db = 0.5 * (b1[0] - b1[1])                         # ()
    wh = jnp.concatenate([wh1, wh2], axis=0)           # (8, 2)
    bh = jnp.concatenate([bh1, bh2], axis=0)           # (8,)
    a = wh[:, 0] * gamma[0] - wh[:, 1] * gamma[1]      # (8,)
    c = wh[:, 0] * beta[0] + wh[:, 1] * beta[1] + bh   # (8,)
    pvec = jnp.concatenate([dw, db[None], a, c]).astype(jnp.float32)   # (20,)

    # --- batch -> (rows, 128 lanes) tiles, feature-major ---
    R = -(-B // _LANE)                                 # ceil(B / 128)
    if R <= _MAX_ROWS:
        Rt = ((R + _SUB - 1) // _SUB) * _SUB           # one step, rows mult of 8
        Rp = Rt
    else:
        Rt = _MAX_ROWS
        Rp = ((R + Rt - 1) // Rt) * Rt
    Bp = Rp * _LANE

    xt = jnp.zeros((IN_F, Bp), jnp.float32).at[:, :B].set(x.astype(jnp.float32).T)
    x3 = xt.reshape(IN_F, Rp, _LANE)

    out = pl.pallas_call(
        _mh_kernel,
        out_shape=jax.ShapeDtypeStruct((2 * OUT_F, Rp, _LANE), jnp.float32),
        grid=(Rp // Rt,),
        in_specs=[
            pl.BlockSpec(memory_space=pltpu.MemorySpace.SMEM),          # packed params
            pl.BlockSpec((IN_F, Rt, _LANE), lambda i: (0, i, 0)),       # x tiles
        ],
        out_specs=pl.BlockSpec((2 * OUT_F, Rt, _LANE), lambda i: (0, i, 0)),
        compiler_params=pltpu.CompilerParams(
            dimension_semantics=("parallel",)),        # batch axis split over TCs (v7x)
    )(pvec, x3)

    flat = out.reshape(2 * OUT_F, Bp)
    out1 = flat[:OUT_F, :B].T                          # (B, 4)
    out2 = flat[OUT_F:, :B].T                          # (B, 4)
    return out1, out2


def init_params(key):
    """Deterministic init mirroring PyTorch defaults (uniform(-1/sqrt(fan_in)))."""
    k1, k2, k3, k4, k5, k6 = jax.random.split(key, 6)

    def lin_init(kw, kb, fan_in, fan_out):
        bound = 1.0 / jnp.sqrt(fan_in)
        w = jax.random.uniform(kw, (fan_out, fan_in), jnp.float32, -bound, bound)
        b = jax.random.uniform(kb, (fan_out,), jnp.float32, -bound, bound)
        return w, b

    w1, b1 = lin_init(k1, k2, IN_F, HID)        # Linear(3, 2)
    gamma = jnp.ones((HID,), jnp.float32)       # LayerNorm(2) weight
    beta = jnp.zeros((HID,), jnp.float32)       # LayerNorm(2) bias
    wh1, bh1 = lin_init(k3, k4, HID, OUT_F)     # head1: Linear(2, 4)
    wh2, bh2 = lin_init(k5, k6, HID, OUT_F)     # head2: Linear(2, 4)
    return (w1, b1, gamma, beta, wh1, bh1, wh2, bh2)


def _reference(x, params):
    # Pure-JAX reference of the PyTorch forward (unfused).
    (w1, b1, gamma, beta, wh1, bh1, wh2, bh2) = params
    h = x @ w1.T + b1
    mu = jnp.mean(h, axis=-1, keepdims=True)
    var = jnp.mean((h - mu) ** 2, axis=-1, keepdims=True)
    feat = (h - mu) / jnp.sqrt(var + LN_EPS) * gamma + beta
    return feat @ wh1.T + bh1, feat @ wh2.T + bh2


if __name__ == "__main__":
    key = jax.random.PRNGKey(0)
    kx, kx2, kp = jax.random.split(key, 3)
    params = init_params(kp)

    # Small batch (as in the original test net usage).
    B = 8
    x = jax.random.normal(kx, (B, IN_F), dtype=jnp.float32)
    out1, out2 = multi_head_test_net(x, params)
    out1 = jax.block_until_ready(out1)
    out2 = jax.block_until_ready(out2)
    ref1, ref2 = _reference(x, params)
    assert out1.shape == (B, OUT_F) and out2.shape == (B, OUT_F)
    assert jnp.allclose(out1, ref1, atol=1e-4, rtol=1e-4)
    assert jnp.allclose(out2, ref2, atol=1e-4, rtol=1e-4)

    # A batch that is not a multiple of 128 (exercises padding + multi-row tile).
    B2 = 200
    x2 = jax.random.normal(kx2, (B2, IN_F), dtype=jnp.float32)
    o1b, o2b = multi_head_test_net(x2, params)
    o1b = jax.block_until_ready(o1b)
    o2b = jax.block_until_ready(o2b)
    r1b, r2b = _reference(x2, params)
    assert jnp.allclose(o1b, r1b, atol=1e-4, rtol=1e-4)
    assert jnp.allclose(o2b, r2b, atol=1e-4, rtol=1e-4)

    print("KERNEL_OK")
</pallas_src>

<mosaic_0001>
module attributes {stable_mosaic.version = 11 : i64} {
  func.func @_mh_kernel(%arg0: i32, %arg1: memref<20xf32, #tpu.memory_space<smem>>, %arg2: memref<3x8x128xf32, #tpu.memory_space<vmem>>, %arg3: memref<8x8x128xf32, #tpu.memory_space<vmem>>) attributes {dimension_semantics = [#tpu.dimension_semantics<parallel>], iteration_bounds = array<i64: 1>, scalar_prefetch = 0 : i64, scratch_operands = 0 : i64, tpu.core_type = #tpu.core_type<tc>, window_params = [{transform_indices = @transform_0, window_bounds = array<i64: 20>}, {transform_indices = @transform_1, window_bounds = array<i64: 3, 8, 128>}, {transform_indices = @transform_2, window_bounds = array<i64: 8, 8, 128>}]} {
    %c0 = arith.constant 0 : index
    %c0_0 = arith.constant 0 : index
    %c0_1 = arith.constant 0 : index
    %0 = vector.load %arg2[%c0, %c0_0, %c0_1] : memref<3x8x128xf32, #tpu.memory_space<vmem>>, vector<1x8x128xf32>
    %1 = vector.shape_cast %0 : vector<1x8x128xf32> to vector<8x128xf32>
    %c1 = arith.constant 1 : index
    %c0_2 = arith.constant 0 : index
    %c0_3 = arith.constant 0 : index
    %2 = vector.load %arg2[%c1, %c0_2, %c0_3] : memref<3x8x128xf32, #tpu.memory_space<vmem>>, vector<1x8x128xf32>
    %3 = vector.shape_cast %2 : vector<1x8x128xf32> to vector<8x128xf32>
    %c2 = arith.constant 2 : index
    %c0_4 = arith.constant 0 : index
    %c0_5 = arith.constant 0 : index
    %4 = vector.load %arg2[%c2, %c0_4, %c0_5] : memref<3x8x128xf32, #tpu.memory_space<vmem>>, vector<1x8x128xf32>
    %5 = vector.shape_cast %4 : vector<1x8x128xf32> to vector<8x128xf32>
    %c0_6 = arith.constant 0 : index
    %6 = memref.load %arg1[%c0_6] : memref<20xf32, #tpu.memory_space<smem>>
    %7 = vector.broadcast %6 : f32 to vector<8x128xf32>
    %8 = arith.mulf %7, %1 : vector<8x128xf32>
    %c1_7 = arith.constant 1 : index
    %9 = memref.load %arg1[%c1_7] : memref<20xf32, #tpu.memory_space<smem>>
    %10 = vector.broadcast %9 : f32 to vector<8x128xf32>
    %11 = arith.mulf %10, %3 : vector<8x128xf32>
    %12 = arith.addf %8, %11 : vector<8x128xf32>
    %c2_8 = arith.constant 2 : index
    %13 = memref.load %arg1[%c2_8] : memref<20xf32, #tpu.memory_space<smem>>
    %14 = vector.broadcast %13 : f32 to vector<8x128xf32>
    %15 = arith.mulf %14, %5 : vector<8x128xf32>
    %16 = arith.addf %12, %15 : vector<8x128xf32>
    %c3 = arith.constant 3 : index
    %17 = memref.load %arg1[%c3] : memref<20xf32, #tpu.memory_space<smem>>
    %18 = vector.broadcast %17 : f32 to vector<8x128xf32>
    %19 = arith.addf %16, %18 : vector<8x128xf32>
    %20 = arith.mulf %19, %19 : vector<8x128xf32>
    %cst = arith.constant 9.99999974E-6 : f32
    %21 = vector.broadcast %cst : f32 to vector<8x128xf32>
    %22 = arith.addf %20, %21 : vector<8x128xf32>
    %23 = math.rsqrt %22 : vector<8x128xf32>
    %24 = arith.mulf %19, %23 : vector<8x128xf32>
    %c4 = arith.constant 4 : index
    %25 = memref.load %arg1[%c4] : memref<20xf32, #tpu.memory_space<smem>>
    %26 = vector.broadcast %25 : f32 to vector<8x128xf32>
    %27 = arith.mulf %26, %24 : vector<8x128xf32>
    %c12 = arith.constant 12 : index
    %28 = memref.load %arg1[%c12] : memref<20xf32, #tpu.memory_space<smem>>
    %29 = vector.broadcast %28 : f32 to vector<8x128xf32>
    %30 = arith.addf %27, %29 : vector<8x128xf32>
    %c0_9 = arith.constant 0 : index
    %c0_10 = arith.constant 0 : index
    %c0_11 = arith.constant 0 : index
    %31 = vector.load %arg3[%c0_9, %c0_10, %c0_11] : memref<8x8x128xf32, #tpu.memory_space<vmem>>, vector<1x8x128xf32>
    %32 = vector.shape_cast %31 : vector<1x8x128xf32> to vector<8x128xf32>
    %33 = vector.shape_cast %30 : vector<8x128xf32> to vector<1x8x128xf32>
    tpu.vector_store %arg3[%c0_9, %c0_10, %c0_11], %33 {strides = array<i32>} : memref<8x8x128xf32, #tpu.memory_space<vmem>>, vector<1x8x128xf32>,
    %c5 = arith.constant 5 : index
    %34 = memref.load %arg1[%c5] : memref<20xf32, #tpu.memory_space<smem>>
    %35 = vector.broadcast %34 : f32 to vector<8x128xf32>
    %36 = arith.mulf %35, %24 : vector<8x128xf32>
    %c13 = arith.constant 13 : index
    %37 = memref.load %arg1[%c13] : memref<20xf32, #tpu.memory_space<smem>>
    %38 = vector.broadcast %37 : f32 to vector<8x128xf32>
    %39 = arith.addf %36, %38 : vector<8x128xf32>
    %c1_12 = arith.constant 1 : index
    %c0_13 = arith.constant 0 : index
    %c0_14 = arith.constant 0 : index
    %40 = vector.load %arg3[%c1_12, %c0_13, %c0_14] : memref<8x8x128xf32, #tpu.memory_space<vmem>>, vector<1x8x128xf32>
    %41 = vector.shape_cast %40 : vector<1x8x128xf32> to vector<8x128xf32>
    %42 = vector.shape_cast %39 : vector<8x128xf32> to vector<1x8x128xf32>
    tpu.vector_store %arg3[%c1_12, %c0_13, %c0_14], %42 {strides = array<i32>} : memref<8x8x128xf32, #tpu.memory_space<vmem>>, vector<1x8x128xf32>,
    %c6 = arith.constant 6 : index
    %43 = memref.load %arg1[%c6] : memref<20xf32, #tpu.memory_space<smem>>
    %44 = vector.broadcast %43 : f32 to vector<8x128xf32>
    %45 = arith.mulf %44, %24 : vector<8x128xf32>
    %c14 = arith.constant 14 : index
    %46 = memref.load %arg1[%c14] : memref<20xf32, #tpu.memory_space<smem>>
    %47 = vector.broadcast %46 : f32 to vector<8x128xf32>
    %48 = arith.addf %45, %47 : vector<8x128xf32>
    %c2_15 = arith.constant 2 : index
    %c0_16 = arith.constant 0 : index
    %c0_17 = arith.constant 0 : index
    %49 = vector.load %arg3[%c2_15, %c0_16, %c0_17] : memref<8x8x128xf32, #tpu.memory_space<vmem>>, vector<1x8x128xf32>
    %50 = vector.shape_cast %49 : vector<1x8x128xf32> to vector<8x128xf32>
    %51 = vector.shape_cast %48 : vector<8x128xf32> to vector<1x8x128xf32>
    tpu.vector_store %arg3[%c2_15, %c0_16, %c0_17], %51 {strides = array<i32>} : memref<8x8x128xf32, #tpu.memory_space<vmem>>, vector<1x8x128xf32>,
    %c7 = arith.constant 7 : index
    %52 = memref.load %arg1[%c7] : memref<20xf32, #tpu.memory_space<smem>>
    %53 = vector.broadcast %52 : f32 to vector<8x128xf32>
    %54 = arith.mulf %53, %24 : vector<8x128xf32>
    %c15 = arith.constant 15 : index
    %55 = memref.load %arg1[%c15] : memref<20xf32, #tpu.memory_space<smem>>
    %56 = vector.broadcast %55 : f32 to vector<8x128xf32>
    %57 = arith.addf %54, %56 : vector<8x128xf32>
    %c3_18 = arith.constant 3 : index
    %c0_19 = arith.constant 0 : index
    %c0_20 = arith.constant 0 : index
    %58 = vector.load %arg3[%c3_18, %c0_19, %c0_20] : memref<8x8x128xf32, #tpu.memory_space<vmem>>, vector<1x8x128xf32>
    %59 = vector.shape_cast %58 : vector<1x8x128xf32> to vector<8x128xf32>
    %60 = vector.shape_cast %57 : vector<8x128xf32> to vector<1x8x128xf32>
    tpu.vector_store %arg3[%c3_18, %c0_19, %c0_20], %60 {strides = array<i32>} : memref<8x8x128xf32, #tpu.memory_space<vmem>>, vector<1x8x128xf32>,
    %c8 = arith.constant 8 : index
    %61 = memref.load %arg1[%c8] : memref<20xf32, #tpu.memory_space<smem>>
    %62 = vector.broadcast %61 : f32 to vector<8x128xf32>
    %63 = arith.mulf %62, %24 : vector<8x128xf32>
    %c16 = arith.constant 16 : index
    %64 = memref.load %arg1[%c16] : memref<20xf32, #tpu.memory_space<smem>>
    %65 = vector.broadcast %64 : f32 to vector<8x128xf32>
    %66 = arith.addf %63, %65 : vector<8x128xf32>
    %c4_21 = arith.constant 4 : index
    %c0_22 = arith.constant 0 : index
    %c0_23 = arith.constant 0 : index
    %67 = vector.load %arg3[%c4_21, %c0_22, %c0_23] : memref<8x8x128xf32, #tpu.memory_space<vmem>>, vector<1x8x128xf32>
    %68 = vector.shape_cast %67 : vector<1x8x128xf32> to vector<8x128xf32>
    %69 = vector.shape_cast %66 : vector<8x128xf32> to vector<1x8x128xf32>
    tpu.vector_store %arg3[%c4_21, %c0_22, %c0_23], %69 {strides = array<i32>} : memref<8x8x128xf32, #tpu.memory_space<vmem>>, vector<1x8x128xf32>,
    %c9 = arith.constant 9 : index
    %70 = memref.load %arg1[%c9] : memref<20xf32, #tpu.memory_space<smem>>
    %71 = vector.broadcast %70 : f32 to vector<8x128xf32>
    %72 = arith.mulf %71, %24 : vector<8x128xf32>
    %c17 = arith.constant 17 : index
    %73 = memref.load %arg1[%c17] : memref<20xf32, #tpu.memory_space<smem>>
    %74 = vector.broadcast %73 : f32 to vector<8x128xf32>
    %75 = arith.addf %72, %74 : vector<8x128xf32>
    %c5_24 = arith.constant 5 : index
    %c0_25 = arith.constant 0 : index
    %c0_26 = arith.constant 0 : index
    %76 = vector.load %arg3[%c5_24, %c0_25, %c0_26] : memref<8x8x128xf32, #tpu.memory_space<vmem>>, vector<1x8x128xf32>
    %77 = vector.shape_cast %76 : vector<1x8x128xf32> to vector<8x128xf32>
    %78 = vector.shape_cast %75 : vector<8x128xf32> to vector<1x8x128xf32>
    tpu.vector_store %arg3[%c5_24, %c0_25, %c0_26], %78 {strides = array<i32>} : memref<8x8x128xf32, #tpu.memory_space<vmem>>, vector<1x8x128xf32>,
    %c10 = arith.constant 10 : index
    %79 = memref.load %arg1[%c10] : memref<20xf32, #tpu.memory_space<smem>>
    %80 = vector.broadcast %79 : f32 to vector<8x128xf32>
    %81 = arith.mulf %80, %24 : vector<8x128xf32>
    %c18 = arith.constant 18 : index
    %82 = memref.load %arg1[%c18] : memref<20xf32, #tpu.memory_space<smem>>
    %83 = vector.broadcast %82 : f32 to vector<8x128xf32>
    %84 = arith.addf %81, %83 : vector<8x128xf32>
    %c6_27 = arith.constant 6 : index
    %c0_28 = arith.constant 0 : index
    %c0_29 = arith.constant 0 : index
    %85 = vector.load %arg3[%c6_27, %c0_28, %c0_29] : memref<8x8x128xf32, #tpu.memory_space<vmem>>, vector<1x8x128xf32>
    %86 = vector.shape_cast %85 : vector<1x8x128xf32> to vector<8x128xf32>
    %87 = vector.shape_cast %84 : vector<8x128xf32> to vector<1x8x128xf32>
    tpu.vector_store %arg3[%c6_27, %c0_28, %c0_29], %87 {strides = array<i32>} : memref<8x8x128xf32, #tpu.memory_space<vmem>>, vector<1x8x128xf32>,
    %c11 = arith.constant 11 : index
    %88 = memref.load %arg1[%c11] : memref<20xf32, #tpu.memory_space<smem>>
    %89 = vector.broadcast %88 : f32 to vector<8x128xf32>
    %90 = arith.mulf %89, %24 : vector<8x128xf32>
    %c19 = arith.constant 19 : index
    %91 = memref.load %arg1[%c19] : memref<20xf32, #tpu.memory_space<smem>>
    %92 = vector.broadcast %91 : f32 to vector<8x128xf32>
    %93 = arith.addf %90, %92 : vector<8x128xf32>
    %c7_30 = arith.constant 7 : index
    %c0_31 = arith.constant 0 : index
    %c0_32 = arith.constant 0 : index
    %94 = vector.load %arg3[%c7_30, %c0_31, %c0_32] : memref<8x8x128xf32, #tpu.memory_space<vmem>>, vector<1x8x128xf32>
    %95 = vector.shape_cast %94 : vector<1x8x128xf32> to vector<8x128xf32>
    %96 = vector.shape_cast %93 : vector<8x128xf32> to vector<1x8x128xf32>
    tpu.vector_store %arg3[%c7_30, %c0_31, %c0_32], %96 {strides = array<i32>} : memref<8x8x128xf32, #tpu.memory_space<vmem>>, vector<1x8x128xf32>,
    return
  }
  func.func @transform_0(%arg0: i32) -> i32 {
    %c0_i32 = arith.constant 0 : i32
    %c0_i32_0 = arith.constant 0 : i32
    return %c0_i32 : i32
  }
  func.func @transform_1(%arg0: i32) -> (i32, i32, i32) {
    %c0_i32 = arith.constant 0 : i32
    %c0_i32_0 = arith.constant 0 : i32
    %c0_i32_1 = arith.constant 0 : i32
    return %c0_i32, %arg0, %c0_i32_0 : i32, i32, i32
  }
  func.func @transform_2(%arg0: i32) -> (i32, i32, i32) {
    %c0_i32 = arith.constant 0 : i32
    %c0_i32_0 = arith.constant 0 : i32
    %c0_i32_1 = arith.constant 0 : i32
    return %c0_i32, %arg0, %c0_i32_0 : i32, i32, i32
  }
}

</mosaic_0001>

<llo_original>
// kernel: tpu_custom_call.1
$region0: #{tpu_custom_call.1}
  #allocation0 [shape = 'u32[]', space=smem, size = 0x4, offset = 0x4, fixed_abs, tag = 'smem constant byte address 0x4 - core index']
  #allocation1 [shape = 'u32[144,128]{1,0:T(1,128)}', space=vmem, size = 0x12000, scoped, tag = 'internal scratch']
  %s0 = inlined_call_operand.hbm [shape: f32[20], index: 0, kind: input, shape index: {}]
  %s1 = inlined_call_operand.hbm [shape: f32[3,8,128], index: 1, kind: input, shape index: {}]
  %s2 = inlined_call_operand.hbm [shape: f32[8,8,128], index: 2, kind: output, shape index: {}]
  %s3 = sld [smem:[#allocation0]]
  $region26: #{tpu_custom_call.1} parent=0
    _
  %s5 = ssub.s32 1, %s3
  %s6 = scalar_select 0, %s5, %s3
  $region1: #{tpu_custom_call.1} parent=0
    #allocation2 [shape = 'u8[512]{0}', space=smem, size = 0x200, scoped, tag = 'input window, operand 0, single buffered']
    #allocation3 [shape = 's32[1]{0}', space=sflag, size = 0x4, scoped, tag = 'scoped memory for tpu_custom_call.1']
    #allocation4 [shape = 's32[1]{0}', space=sflag, size = 0x4, scoped, tag = 'scoped memory for tpu_custom_call.1']
    #allocation5 [shape = 's32[1]{0}', space=sflag, size = 0x4, scoped, tag = 'scoped memory for tpu_custom_call.1']
    #allocation6 [shape = 'u8[12288]{0}', space=vmem, size = 0x3000, scoped, tag = 'input window, operand 1, single buffered']
    #allocation7 [shape = 'u8[32768]{0}', space=vmem, size = 0x8000, scoped, tag = 'output window, operand 0, single buffered']
    %7 = vsyncpa [#allocation5], 0
    %8 = vsyncpa [#allocation3], 0
    %9 = vsyncpa [#allocation4], 0
    // Predicated region
    $region2: #{tpu_custom_call.1} parent=1 // pred_check
      _
    $region3: #{tpu_custom_call.1} parent=1 // pred_check_branch
      %11 = sbr.rel (0) target = $region5
    $region4: #{tpu_custom_call.1} parent=1 // pred_region
      %s13 = ssub.s32 16, 16
      %14 = vsyncadd [#allocation5], %s13
      %17 = dma.hbm_to_smem %s0, 16, [#allocation2], [#allocation5]
    $region5: #{tpu_custom_call.1} parent=1 // pred_fallthru
      _
    // Predicated region
    $region6: #{tpu_custom_call.1} parent=1 // pred_check
      _
    $region7: #{tpu_custom_call.1} parent=1 // pred_check_branch
      %19 = sbr.rel (0) target = $region9
    $region8: #{tpu_custom_call.1} parent=1 // pred_region
      %s21 = ssub.s32 384, 384
      %22 = vsyncadd [#allocation3], %s21
      %s23 = sshll.u32 [#allocation6], 4
      %s24 = int_to_ptr.vmem [resolvable:$true] %s23
      %29 = dma.hbm_to_vmem [thread:$0]  %s1, 384, %s24, [#allocation3], 128, 128, 8
    $region9: #{tpu_custom_call.1} parent=1 // pred_fallthru
      _
    // Predicated region
    $region10: #{tpu_custom_call.1} parent=1 // pred_check
      _
    $region11: #{tpu_custom_call.1} parent=1 // pred_check_branch
      %31 = sbr.rel (0) target = $region13
    $region12: #{tpu_custom_call.1} parent=1 // pred_region
      %32 = dma.done [#allocation5], 16
    $region13: #{tpu_custom_call.1} parent=1 // pred_fallthru
      _
    // Predicated region
    $region14: #{tpu_custom_call.1} parent=1 // pred_check
      _
    $region15: #{tpu_custom_call.1} parent=1 // pred_check_branch
      %34 = sbr.rel (0) target = $region17
    $region16: #{tpu_custom_call.1} parent=1 // pred_region
      %35 = dma.done [#allocation3], 384
    $region17: #{tpu_custom_call.1} parent=1 // pred_fallthru
      _
    %36 = sfence
    %v37 = vld [vmem:[#allocation6] sm:$0xff]
    %s38 = scalar_lea.vmem [#allocation6], 8
    %v39 = vld [vmem:[%s38] sm:$0xff]
    %s40 = scalar_lea.vmem [#allocation6], 16
    %v41 = vld [vmem:[%s40] sm:$0xff]
    %s42 = sld [smem:[#allocation2]]
    %v43 = vstv %s42
    %v44 = vmul.f32 %v43, %v37
    %s45 = sld [smem:[#allocation2 + $0x1]]
    %v46 = vstv %s45
    %v47 = vmul.f32 %v46, %v39
    %v48 = vadd.f32 %v44, %v47
    %s49 = sld [smem:[#allocation2 + $0x2]]
    %v50 = vstv %s49
    %v51 = vmul.f32 %v50, %v41
    %v52 = vadd.f32 %v48, %v51
    %s53 = sld [smem:[#allocation2 + $0x3]]
    %v54 = vstv %s53
    %v55 = vadd.f32 %v52, %v54
    %v56 = vmul.f32 %v55, %v55
    %v57 = vadd.f32 %v56, 1e-05
    %v58 = vrsqrt.pop %v57
    %v59 = vmul.f32 %v55, %v58
    %s60 = sld [smem:[#allocation2 + $0x4]]
    %v61 = vstv %s60
    %v62 = vmul.f32 %v61, %v59
    %s63 = sld [smem:[#allocation2 + $0xc]]
    %v64 = vstv %s63
    %v65 = vadd.f32 %v62, %v64
    %66 = vst [vmem:[#allocation7] sm:$0xff] %v65
    %s67 = sld [smem:[#allocation2 + $0x5]]
    %v68 = vstv %s67
    %v69 = vmul.f32 %v68, %v59
    %s70 = sld [smem:[#allocation2 + $0xd]]
    %v71 = vstv %s70
    %v72 = vadd.f32 %v69, %v71
    %s73 = scalar_lea.vmem [#allocation7], 8
    %74 = vst [vmem:[%s73] sm:$0xff] %v72
    %s75 = sld [smem:[#allocation2 + $0x6]]
    %v76 = vstv %s75
    %v77 = vmul.f32 %v76, %v59
    %s78 = sld [smem:[#allocation2 + $0xe]]
    %v79 = vstv %s78
    %v80 = vadd.f32 %v77, %v79
    %s81 = scalar_lea.vmem [#allocation7], 16
    %82 = vst [vmem:[%s81] sm:$0xff] %v80
    %s83 = sld [smem:[#allocation2 + $0x7]]
    %v84 = vstv %s83
    %v85 = vmul.f32 %v84, %v59
    %s86 = sld [smem:[#allocation2 + $0xf]]
    %v87 = vstv %s86
    %v88 = vadd.f32 %v85, %v87
    %s89 = scalar_lea.vmem [#allocation7], 24
    %90 = vst [vmem:[%s89] sm:$0xff] %v88
    %s91 = sld [smem:[#allocation2 + $0x8]]
    %v92 = vstv %s91
    %v93 = vmul.f32 %v92, %v59
    %s94 = sld [smem:[#allocation2 + $0x10]]
    %v95 = vstv %s94
    %v96 = vadd.f32 %v93, %v95
    %s97 = scalar_lea.vmem [#allocation7], 32
    %98 = vst [vmem:[%s97] sm:$0xff] %v96
    %s99 = sld [smem:[#allocation2 + $0x9]]
    %v100 = vstv %s99
    %v101 = vmul.f32 %v100, %v59
    %s102 = sld [smem:[#allocation2 + $0x11]]
    %v103 = vstv %s102
    %v104 = vadd.f32 %v101, %v103
    %s105 = scalar_lea.vmem [#allocation7], 40
    %106 = vst [vmem:[%s105] sm:$0xff] %v104
    %s107 = sld [smem:[#allocation2 + $0xa]]
    %v108 = vstv %s107
    %v109 = vmul.f32 %v108, %v59
    %s110 = sld [smem:[#allocation2 + $0x12]]
    %v111 = vstv %s110
    %v112 = vadd.f32 %v109, %v111
    %s113 = scalar_lea.vmem [#allocation7], 48
    %114 = vst [vmem:[%s113] sm:$0xff] %v112
    %s115 = sld [smem:[#allocation2 + $0xb]]
    %v116 = vstv %s115
    %v117 = vmul.f32 %v116, %v59
    %s118 = sld [smem:[#allocation2 + $0x13]]
    %v119 = vstv %s118
    %v120 = vadd.f32 %v117, %v119
    %s121 = scalar_lea.vmem [#allocation7], 56
    %122 = vst [vmem:[%s121] sm:$0xff] %v120
    // Predicated region
    $region18: #{tpu_custom_call.1} parent=1 // pred_check
      _
    $region19: #{tpu_custom_call.1} parent=1 // pred_check_branch
      %124 = sbr.rel (0) target = $region21
    $region20: #{tpu_custom_call.1} parent=1 // pred_region
      %s126 = ssub.s32 1024, 1024
      %127 = vsyncadd [#allocation4], %s126
      %s128 = sshll.u32 [#allocation7], 4
      %s129 = int_to_ptr.vmem [resolvable:$true] %s128
      %134 = dma.vmem_to_hbm [thread:$0]  %s129, 1024, %s2, [#allocation4], 128, 128, 8
    $region21: #{tpu_custom_call.1} parent=1 // pred_fallthru
      _
    // Predicated region
    $region22: #{tpu_custom_call.1} parent=1 // pred_check
      _
    $region23: #{tpu_custom_call.1} parent=1 // pred_check_branch
      %136 = sbr.rel (0) target = $region25
    $region24: #{tpu_custom_call.1} parent=1 // pred_region
      %137 = dma.done [#allocation4], 1024
    $region25: #{tpu_custom_call.1} parent=1 // pred_fallthru
      _
    %138 = vsyncpa [#allocation3], 1
    %139 = vsyncpa [#allocation4], 1
    %140 = vsyncpa [#allocation5], 1

</llo_original>
